<compile_context>
chip_gen: v5e
topology: v5e:2x2
jax: 0.10.0
libtpu: 0.0.40
codegen_flags: <defaults>
</compile_context>

<pallas_src>
import jax
import jax.numpy as jnp
from jax.experimental import pallas as pl
from jax.experimental.pallas import tpu as pltpu


def _round_up(x, m):
    return ((x + m - 1) // m) * m


def _choose_batch_tile(batch, max_batch_tile):
    """Pick TB (multiple of 128) that divides the 128-rounded batch.

    Prefers >= 2 grid steps so dimension_semantics=("parallel",) can shard the
    batch across both TensorCores on v7x; falls back to a single 128-row tile
    for batches <= 128.
    """
    b128 = _round_up(max(batch, 1), 128)
    nb = b128 // 128
    max_units = max(1, max_batch_tile // 128)
    divisors = [d for d in range(1, min(nb, max_units) + 1) if nb % d == 0]
    best = max(divisors)
    if nb // best < 2 and nb >= 2:
        best = max(d for d in divisors if nb // d >= 2)
    return 128 * best, b128


def _ppo_critic_kernel(obs_ref, w1_ref, b1_ref, w2_ref, b2_ref, wv_ref, bv_ref,
                       out_ref):
    # preprocess_obs: cast to float32 (obs may arrive in any dtype).
    x = obs_ref[...].astype(jnp.float32)

    # extractor layer 1: Linear + ReLU.  bf16 MXU operands, f32 accumulate;
    # bias add / ReLU stay in f32 (v5e VPU has no bf16 elementwise).
    h1 = jnp.dot(x.astype(jnp.bfloat16), w1_ref[...],
                 preferred_element_type=jnp.float32)
    h1 = jnp.maximum(h1 + b1_ref[...], 0.0)

    # extractor layer 2: Linear + ReLU.
    h2 = jnp.dot(h1.astype(jnp.bfloat16), w2_ref[...],
                 preferred_element_type=jnp.float32)
    h2 = jnp.maximum(h2 + b2_ref[...], 0.0)

    # value head: (TB, Hp) @ (Hp, 1) -> (TB, 1).  Keeping wv as a column avoids
    # a per-step (TB, Hp) transpose through the XLU; the (TB, 1) store is only
    # TB*4 bytes per tile.
    v = jnp.dot(h2.astype(jnp.bfloat16), wv_ref[...],
                preferred_element_type=jnp.float32)
    out_ref[...] = (v + bv_ref[0, 0]).astype(out_ref.dtype)   # scalar bias (SMEM)


def ppo_critic_forward(obs, params, *, max_batch_tile=1024):
    """Fused PPOCritic forward.  Returns per-sample values of shape (B,).

    `params` holds pre-padded weights (feature dims rounded up to 128):
      w1 (obs_dim_p, h1_p) bf16, b1 (1, h1_p) f32,
      w2 (h1_p,    h2_p)   bf16, b2 (1, h2_p) f32,
      wv (h2_p, 1)         bf16, bv (1, 1)    f32.
    """
    w1, b1, w2, b2, wv, bv = params
    B, obs_dim = obs.shape
    obs_dim_p, h1_p = w1.shape
    h2_p = w2.shape[1]

    TB, B_padded = _choose_batch_tile(B, max_batch_tile)
    num_tiles = B_padded // TB

    # Pad only when handed unaligned shapes; in production keep B a multiple of
    # 128 and obs_dim pre-padded so this copy (extra HBM read+write) is a no-op.
    if B_padded != B or obs_dim_p != obs_dim:
        obs = jnp.pad(obs, ((0, B_padded - B), (0, obs_dim_p - obs_dim)))

    flops = 2 * B_padded * (obs_dim_p * h1_p + h1_p * h2_p + h2_p)
    bytes_accessed = (
        int(obs.size) * obs.dtype.itemsize
        + sum(int(p.size) * p.dtype.itemsize for p in (w1, b1, w2, b2, wv, bv))
        + B_padded * 4)

    # VMEM budget: double-buffered obs/out tiles + (double-buffered) resident
    # weights + activation temps, with headroom; capped for v7x's 64 MiB/TC.
    weight_bytes = sum(int(p.size) * p.dtype.itemsize for p in (w1, b1, w2, b2, wv))
    tile_bytes = TB * obs_dim_p * obs.dtype.itemsize + TB * 4
    act_bytes = TB * (h1_p + h2_p) * 6
    vmem_limit = int(2 * weight_bytes + 2 * tile_bytes + act_bytes + (8 << 20))
    vmem_limit = max(32 << 20, min(vmem_limit, 48 << 20))

    out = pl.pallas_call(
        _ppo_critic_kernel,
        out_shape=jax.ShapeDtypeStruct((B_padded, 1), jnp.float32),
        grid_spec=pltpu.PrefetchScalarGridSpec(
            num_scalar_prefetch=0,
            grid=(num_tiles,),
            in_specs=[
                # obs: streamed per batch tile (auto double-buffered by Pallas).
                pl.BlockSpec((TB, obs_dim_p), lambda i: (i, 0)),
                # weights / biases: constant block index -> VMEM-resident.
                # TODO(synk): single-buffer these resident operands
                # (pipeline_mode=pl.Buffered(1)) once verified on the target
                # jax version; at these padded sizes the extra buffered copies
                # cost < 150 KiB of VMEM.
                pl.BlockSpec(w1.shape, lambda i: (0, 0)),
                pl.BlockSpec(b1.shape, lambda i: (0, 0)),
                pl.BlockSpec(w2.shape, lambda i: (0, 0)),
                pl.BlockSpec(b2.shape, lambda i: (0, 0)),
                pl.BlockSpec(wv.shape, lambda i: (0, 0)),
                # (1,1) scalar bias on the scalar path.
                pl.BlockSpec(memory_space=pltpu.MemorySpace.SMEM),
            ],
            out_specs=pl.BlockSpec((TB, 1), lambda i: (i, 0)),
        ),
        compiler_params=pltpu.CompilerParams(
            dimension_semantics=("parallel",),        # megacore sharding on v7x
            vmem_limit_bytes=vmem_limit,
        ),
        cost_estimate=pl.CostEstimate(
            flops=flops, transcendentals=0, bytes_accessed=bytes_accessed),
    )(obs, w1, b1, w2, b2, wv, bv)

    # (B_padded, 1) -> (B,)   (the module's .squeeze(dim=-1))
    return out.reshape(B_padded)[:B]


def init_params(key, obs_dim, hidden_dim):
    """Parameters matching the module, stored pre-padded for the kernel.

    Extractor: Linear(obs_dim, hidden) -> ReLU -> Linear(hidden, hidden) -> ReLU
    value_out: Linear(hidden, 1)
    Weights stored transposed as (in, out), padded to multiples of 128 lanes
    (pad region zero) and kept in bf16 (MXU operands); biases stay f32.
    """
    obs_dim_p = _round_up(obs_dim, 128)
    hid_p = _round_up(hidden_dim, 128)
    k1, k2, k3 = jax.random.split(key, 3)
    s1 = 1.0 / jnp.sqrt(obs_dim)
    s2 = 1.0 / jnp.sqrt(hidden_dim)

    w1 = jnp.zeros((obs_dim_p, hid_p), jnp.float32).at[:obs_dim, :hidden_dim].set(
        jax.random.uniform(k1, (obs_dim, hidden_dim), jnp.float32, -s1, s1))
    w2 = jnp.zeros((hid_p, hid_p), jnp.float32).at[:hidden_dim, :hidden_dim].set(
        jax.random.uniform(k2, (hidden_dim, hidden_dim), jnp.float32, -s2, s2))
    wv = jnp.zeros((hid_p, 1), jnp.float32).at[:hidden_dim, 0].set(
        jax.random.uniform(k3, (hidden_dim,), jnp.float32, -s2, s2))

    b1 = jnp.zeros((1, hid_p), jnp.float32)
    b2 = jnp.zeros((1, hid_p), jnp.float32)
    bv = jnp.zeros((1, 1), jnp.float32)
    return (w1.astype(jnp.bfloat16), b1, w2.astype(jnp.bfloat16), b2,
            wv.astype(jnp.bfloat16), bv)


def _reference(obs, params):
    """Pure-JAX reference: f32 math over the same (bf16-stored) weights."""
    w1, b1, w2, b2, wv, bv = params
    x = obs.astype(jnp.float32)
    x = jnp.pad(x, ((0, 0), (0, w1.shape[0] - x.shape[1])))
    h1 = jnp.maximum(x @ w1.astype(jnp.float32) + b1, 0.0)
    h2 = jnp.maximum(h1 @ w2.astype(jnp.float32) + b2, 0.0)
    return (h2 @ wv.astype(jnp.float32) + bv)[:, 0]


if __name__ == "__main__":
    B, OBS_DIM, HIDDEN = 8, 32, 32

    key = jax.random.PRNGKey(0)
    k_obs, k_params = jax.random.split(key)
    obs = jax.random.normal(k_obs, (B, OBS_DIM), dtype=jnp.float32)
    params = init_params(k_params, OBS_DIM, HIDDEN)

    values = jax.block_until_ready(ppo_critic_forward(obs, params))
    ref = _reference(obs, params)

    assert values.shape == (B,), values.shape
    # bf16 matmul operands with f32 accumulation -> relaxed tolerance.
    assert jnp.allclose(values, ref, atol=2e-2, rtol=2e-2), (
        jnp.max(jnp.abs(values - ref)))
    print("KERNEL_OK")
</pallas_src>

<mosaic_0001>
module attributes {stable_mosaic.version = 11 : i64} {
  func.func @_ppo_critic_kernel(%arg0: i32, %arg1: memref<128x128xf32, #tpu.memory_space<vmem>>, %arg2: memref<128x128xbf16, #tpu.memory_space<vmem>>, %arg3: memref<1x128xf32, #tpu.memory_space<vmem>>, %arg4: memref<128x128xbf16, #tpu.memory_space<vmem>>, %arg5: memref<1x128xf32, #tpu.memory_space<vmem>>, %arg6: memref<128x1xbf16, #tpu.memory_space<vmem>>, %arg7: memref<1x1xf32, #tpu.memory_space<smem>>, %arg8: memref<128x1xf32, #tpu.memory_space<vmem>>) attributes {dimension_semantics = [#tpu.dimension_semantics<parallel>], iteration_bounds = array<i64: 1>, scalar_prefetch = 0 : i64, scratch_operands = 0 : i64, tpu.core_type = #tpu.core_type<tc>, window_params = [{transform_indices = @transform_0, window_bounds = array<i64: 128, 128>}, {pipeline_mode = #tpu.pipeline_mode<synchronous>, transform_indices = @transform_1, window_bounds = array<i64: 128, 128>}, {pipeline_mode = #tpu.pipeline_mode<synchronous>, transform_indices = @transform_2, window_bounds = array<i64: 1, 128>}, {pipeline_mode = #tpu.pipeline_mode<synchronous>, transform_indices = @transform_3, window_bounds = array<i64: 128, 128>}, {pipeline_mode = #tpu.pipeline_mode<synchronous>, transform_indices = @transform_4, window_bounds = array<i64: 1, 128>}, {pipeline_mode = #tpu.pipeline_mode<synchronous>, transform_indices = @transform_5, window_bounds = array<i64: 128, 1>}, {transform_indices = @transform_6, window_bounds = array<i64: 1, 1>}, {transform_indices = @transform_7, window_bounds = array<i64: 128, 1>}]} {
    %c0 = arith.constant 0 : index
    %c0_0 = arith.constant 0 : index
    %0 = vector.load %arg1[%c0, %c0_0] : memref<128x128xf32, #tpu.memory_space<vmem>>, vector<128x128xf32>
    %1 = arith.truncf %0 : vector<128x128xf32> to vector<128x128xbf16>
    %c0_1 = arith.constant 0 : index
    %c0_2 = arith.constant 0 : index
    %2 = vector.load %arg2[%c0_1, %c0_2] : memref<128x128xbf16, #tpu.memory_space<vmem>>, vector<128x128xbf16>
    %cst = arith.constant dense<0.000000e+00> : vector<128x128xf32>
    %3 = tpu.matmul %1, %2, %cst {dimension_numbers = #tpu.dot_dimension_numbers<[1], [0], [0], [1], [0, 0, 1, 1], [], []>} : vector<128x128xbf16>, vector<128x128xbf16>, vector<128x128xf32> -> vector<128x128xf32>
    %c0_3 = arith.constant 0 : index
    %c0_4 = arith.constant 0 : index
    %4 = vector.load %arg3[%c0_3, %c0_4] : memref<1x128xf32, #tpu.memory_space<vmem>>, vector<1x128xf32>
    %5 = vector.broadcast %4 : vector<1x128xf32> to vector<128x128xf32>
    %6 = arith.addf %3, %5 : vector<128x128xf32>
    %cst_5 = arith.constant 0.000000e+00 : f32
    %7 = vector.broadcast %cst_5 : f32 to vector<128x128xf32>
    %8 = arith.maximumf %6, %7 : vector<128x128xf32>
    %9 = arith.truncf %8 : vector<128x128xf32> to vector<128x128xbf16>
    %c0_6 = arith.constant 0 : index
    %c0_7 = arith.constant 0 : index
    %10 = vector.load %arg4[%c0_6, %c0_7] : memref<128x128xbf16, #tpu.memory_space<vmem>>, vector<128x128xbf16>
    %cst_8 = arith.constant dense<0.000000e+00> : vector<128x128xf32>
    %11 = tpu.matmul %9, %10, %cst_8 {dimension_numbers = #tpu.dot_dimension_numbers<[1], [0], [0], [1], [0, 0, 1, 1], [], []>} : vector<128x128xbf16>, vector<128x128xbf16>, vector<128x128xf32> -> vector<128x128xf32>
    %c0_9 = arith.constant 0 : index
    %c0_10 = arith.constant 0 : index
    %12 = vector.load %arg5[%c0_9, %c0_10] : memref<1x128xf32, #tpu.memory_space<vmem>>, vector<1x128xf32>
    %13 = vector.broadcast %12 : vector<1x128xf32> to vector<128x128xf32>
    %14 = arith.addf %11, %13 : vector<128x128xf32>
    %cst_11 = arith.constant 0.000000e+00 : f32
    %15 = vector.broadcast %cst_11 : f32 to vector<128x128xf32>
    %16 = arith.maximumf %14, %15 : vector<128x128xf32>
    %17 = arith.truncf %16 : vector<128x128xf32> to vector<128x128xbf16>
    %c0_12 = arith.constant 0 : index
    %c0_13 = arith.constant 0 : index
    %18 = vector.load %arg6[%c0_12, %c0_13] : memref<128x1xbf16, #tpu.memory_space<vmem>>, vector<128x1xbf16>
    %cst_14 = arith.constant dense<0.000000e+00> : vector<128x1xf32>
    %19 = tpu.matmul %17, %18, %cst_14 {dimension_numbers = #tpu.dot_dimension_numbers<[1], [0], [0], [1], [0, 0, 1, 1], [], []>} : vector<128x128xbf16>, vector<128x1xbf16>, vector<128x1xf32> -> vector<128x1xf32>
    %c0_15 = arith.constant 0 : index
    %c0_16 = arith.constant 0 : index
    %20 = memref.load %arg7[%c0_15, %c0_16] : memref<1x1xf32, #tpu.memory_space<smem>>
    %21 = vector.broadcast %20 : f32 to vector<128x1xf32>
    %22 = arith.addf %19, %21 : vector<128x1xf32>
    %c0_17 = arith.constant 0 : index
    %c0_18 = arith.constant 0 : index
    %23 = vector.load %arg8[%c0_17, %c0_18] : memref<128x1xf32, #tpu.memory_space<vmem>>, vector<128x1xf32>
    tpu.vector_store %arg8[%c0_17, %c0_18], %22 {strides = array<i32>} : memref<128x1xf32, #tpu.memory_space<vmem>>, vector<128x1xf32>,
    return
  }
  func.func @transform_0(%arg0: i32) -> (i32, i32) {
    %c0_i32 = arith.constant 0 : i32
    %c0_i32_0 = arith.constant 0 : i32
    return %arg0, %c0_i32 : i32, i32
  }
  func.func @transform_1(%arg0: i32) -> (i32, i32) {
    %c0_i32 = arith.constant 0 : i32
    %c0_i32_0 = arith.constant 0 : i32
    %c0_i32_1 = arith.constant 0 : i32
    return %c0_i32, %c0_i32_0 : i32, i32
  }
  func.func @transform_2(%arg0: i32) -> (i32, i32) {
    %c0_i32 = arith.constant 0 : i32
    %c0_i32_0 = arith.constant 0 : i32
    %c0_i32_1 = arith.constant 0 : i32
    return %c0_i32, %c0_i32_0 : i32, i32
  }
  func.func @transform_3(%arg0: i32) -> (i32, i32) {
    %c0_i32 = arith.constant 0 : i32
    %c0_i32_0 = arith.constant 0 : i32
    %c0_i32_1 = arith.constant 0 : i32
    return %c0_i32, %c0_i32_0 : i32, i32
  }
  func.func @transform_4(%arg0: i32) -> (i32, i32) {
    %c0_i32 = arith.constant 0 : i32
    %c0_i32_0 = arith.constant 0 : i32
    %c0_i32_1 = arith.constant 0 : i32
    return %c0_i32, %c0_i32_0 : i32, i32
  }
  func.func @transform_5(%arg0: i32) -> (i32, i32) {
    %c0_i32 = arith.constant 0 : i32
    %c0_i32_0 = arith.constant 0 : i32
    %c0_i32_1 = arith.constant 0 : i32
    return %c0_i32, %c0_i32_0 : i32, i32
  }
  func.func @transform_6(%arg0: i32) -> (i32, i32) {
    %c0_i32 = arith.constant 0 : i32
    %c0_i32_0 = arith.constant 0 : i32
    %c0_i32_1 = arith.constant 0 : i32
    return %c0_i32, %c0_i32_0 : i32, i32
  }
  func.func @transform_7(%arg0: i32) -> (i32, i32) {
    %c0_i32 = arith.constant 0 : i32
    %c0_i32_0 = arith.constant 0 : i32
    return %arg0, %c0_i32 : i32, i32
  }
}

</mosaic_0001>

<llo_original>
// kernel: tpu_custom_call.1
$region0: #{tpu_custom_call.1}
  #allocation0 [shape = 'u32[]', space=smem, size = 0x4, offset = 0x4, fixed_abs, tag = 'smem constant byte address 0x4 - core index']
  #allocation1 [shape = 'u32[72,128]{1,0:T(1,128)}', space=vmem, size = 0x9000, scoped, tag = 'internal scratch']
  #allocation2 [shape = 'f32[1,1]{1,0:T(1,128)S(6)}', space=smem, size = 0x200, scoped, tag = 'scoped memory for tpu_custom_call.1']
  %s0 = inlined_call_operand.hbm [shape: f32[128,128], index: 0, kind: input, shape index: {}]
  %s1 = inlined_call_operand.vmem [shape: bf16[128,128], index: 1, kind: input, shape index: {}]
  %s2 = inlined_call_operand.vmem [shape: f32[1,128], index: 2, kind: input, shape index: {}]
  %s3 = inlined_call_operand.hbm [shape: bf16[128,128], index: 3, kind: input, shape index: {}]
  %s4 = inlined_call_operand.vmem [shape: f32[1,128], index: 4, kind: input, shape index: {}]
  %s5 = inlined_call_operand.vmem [shape: bf16[128,1], index: 5, kind: input, shape index: {}]
  %s6 = inlined_call_operand.<no memory space> [shape: f32[1,1], index: 6, kind: input, shape index: {}]
  %s7 = inlined_call_operand.vmem [shape: f32[128,1], index: 7, kind: output, shape index: {}]
  %s8 = sld [smem:[#allocation0]]
  $region46: #{tpu_custom_call.1} parent=0
    _
  %s10 = ssub.s32 1, %s8
  %s11 = scalar_select 0, %s10, %s8
  %12 = sst [smem:[#allocation2]] %s6
  $region1: #{tpu_custom_call.1} parent=0
    #allocation3 [shape = 'u8[65536]{0}', space=vmem, size = 0x10000, scoped, tag = 'input window, operand 0, single buffered']
    #allocation4 [shape = 's32[1]{0}', space=sflag, size = 0x4, scoped, tag = 'scoped memory for tpu_custom_call.1']
    #allocation5 [shape = 'u8[32768]{0}', space=vmem, size = 0x8000, scoped, tag = 'input window, operand 3, single buffered']
    #allocation6 [shape = 's32[1]{0}', space=sflag, size = 0x4, scoped, tag = 'scoped memory for tpu_custom_call.1']
    %13 = vsyncpa [#allocation4], 0
    %14 = vsyncpa [#allocation6], 0
    // Predicated region
    $region2: #{tpu_custom_call.1} parent=1 // pred_check
      _
    $region3: #{tpu_custom_call.1} parent=1 // pred_check_branch
      %16 = sbr.rel (0) target = $region5
    $region4: #{tpu_custom_call.1} parent=1 // pred_region
      %18 = vsyncadd [#allocation4], 0
      %s19 = sshll.u32 %s0, 4
      %s20 = int_to_ptr.hbm [resolvable:$true] %s19
      %s21 = sshll.u32 [#allocation3], 4
      %s22 = int_to_ptr.vmem [resolvable:$true] %s21
      %27 = dma.hbm_to_vmem [thread:$0]  %s20, 2048, %s22, [#allocation4], 128, 128, 8
    $region5: #{tpu_custom_call.1} parent=1 // pred_fallthru
      _
    // Predicated region
    $region6: #{tpu_custom_call.1} parent=1 // pred_check
      _
    $region7: #{tpu_custom_call.1} parent=1 // pred_check_branch
      %29 = sbr.rel (0) target = $region9
    $region8: #{tpu_custom_call.1} parent=1 // pred_region
      _
    $region9: #{tpu_custom_call.1} parent=1 // pred_fallthru
      _
    // Predicated region
    $region10: #{tpu_custom_call.1} parent=1 // pred_check
      _
    $region11: #{tpu_custom_call.1} parent=1 // pred_check_branch
      %31 = sbr.rel (0) target = $region13
    $region12: #{tpu_custom_call.1} parent=1 // pred_region
      _
    $region13: #{tpu_custom_call.1} parent=1 // pred_fallthru
      _
    // Predicated region
    $region14: #{tpu_custom_call.1} parent=1 // pred_check
      _
    $region15: #{tpu_custom_call.1} parent=1 // pred_check_branch
      %33 = sbr.rel (0) target = $region17
    $region16: #{tpu_custom_call.1} parent=1 // pred_region
      %35 = vsyncadd [#allocation6], 0
      %s36 = sshll.u32 %s3, 4
      %s37 = int_to_ptr.hbm [resolvable:$true] %s36
      %s38 = sshll.u32 [#allocation5], 4
      %s39 = int_to_ptr.vmem [resolvable:$true] %s38
      %44 = dma.hbm_to_vmem [thread:$0]  %s37, 1024, %s39, [#allocation6], 64, 64, 4
    $region17: #{tpu_custom_call.1} parent=1 // pred_fallthru
      _
    // Predicated region
    $region18: #{tpu_custom_call.1} parent=1 // pred_check
      _
    $region19: #{tpu_custom_call.1} parent=1 // pred_check_branch
      %46 = sbr.rel (0) target = $region21
    $region20: #{tpu_custom_call.1} parent=1 // pred_region
      _
    $region21: #{tpu_custom_call.1} parent=1 // pred_fallthru
      _
    // Predicated region
    $region22: #{tpu_custom_call.1} parent=1 // pred_check
      _
    $region23: #{tpu_custom_call.1} parent=1 // pred_check_branch
      %48 = sbr.rel (0) target = $region25
    $region24: #{tpu_custom_call.1} parent=1 // pred_region
      _
    $region25: #{tpu_custom_call.1} parent=1 // pred_fallthru
      _
    // Predicated region
    $region26: #{tpu_custom_call.1} parent=1 // pred_check
      _
    $region27: #{tpu_custom_call.1} parent=1 // pred_check_branch
      %50 = sbr.rel (0) target = $region29
    $region28: #{tpu_custom_call.1} parent=1 // pred_region
      _
    $region29: #{tpu_custom_call.1} parent=1 // pred_fallthru
      _
    // Predicated region
    $region30: #{tpu_custom_call.1} parent=1 // pred_check
      _
    $region31: #{tpu_custom_call.1} parent=1 // pred_check_branch
      %52 = sbr.rel (0) target = $region33
    $region32: #{tpu_custom_call.1} parent=1 // pred_region
      %54 = dma.done [#allocation4], 2048
    $region33: #{tpu_custom_call.1} parent=1 // pred_fallthru
      _
    // Predicated region
    $region34: #{tpu_custom_call.1} parent=1 // pred_check
      _
    $region35: #{tpu_custom_call.1} parent=1 // pred_check_branch
      %56 = sbr.rel (0) target = $region37
    $region36: #{tpu_custom_call.1} parent=1 // pred_region
      %58 = dma.done [#allocation6], 1024
    $region37: #{tpu_custom_call.1} parent=1 // pred_fallthru
      _
    %v59 = vld [vmem:[#allocation3] sm:$0xff]
    %v60 = vld [vmem:[#allocation3 + $0x8] sm:$0xff]
    %v61 = vld [vmem:[#allocation3 + $0x10] sm:$0xff]
    %v62 = vld [vmem:[#allocation3 + $0x18] sm:$0xff]
    %v63 = vld [vmem:[#allocation3 + $0x20] sm:$0xff]
    %v64 = vld [vmem:[#allocation3 + $0x28] sm:$0xff]
    %v65 = vld [vmem:[#allocation3 + $0x30] sm:$0xff]
    %v66 = vld [vmem:[#allocation3 + $0x38] sm:$0xff]
    %v67 = vld [vmem:[#allocation3 + $0x40] sm:$0xff]
    %v68 = vld [vmem:[#allocation3 + $0x48] sm:$0xff]
    %v69 = vld [vmem:[#allocation3 + $0x50] sm:$0xff]
    %v70 = vld [vmem:[#allocation3 + $0x58] sm:$0xff]
    %v71 = vld [vmem:[#allocation3 + $0x60] sm:$0xff]
    %v72 = vld [vmem:[#allocation3 + $0x68] sm:$0xff]
    %v73 = vld [vmem:[#allocation3 + $0x70] sm:$0xff]
    %v74 = vld [vmem:[#allocation3 + $0x78] sm:$0xff]
    %v75 = vpack.c.bf16 %v60, %v59
    %v76 = vpack.c.bf16 %v62, %v61
    %v77 = vpack.c.bf16 %v64, %v63
    %v78 = vpack.c.bf16 %v66, %v65
    %v79 = vpack.c.bf16 %v68, %v67
    %v80 = vpack.c.bf16 %v70, %v69
    %v81 = vpack.c.bf16 %v72, %v71
    %v82 = vpack.c.bf16 %v74, %v73
    %v83 = vld [vmem:[%s1] sm:$0xf]
    %v84 = vld [vmem:[%s1 + $0x4] sm:$0xf]
    %v85 = vld [vmem:[%s1 + $0x8] sm:$0xf]
    %v86 = vld [vmem:[%s1 + $0xc] sm:$0xf]
    %v87 = vld [vmem:[%s1 + $0x10] sm:$0xf]
    %v88 = vld [vmem:[%s1 + $0x14] sm:$0xf]
    %v89 = vld [vmem:[%s1 + $0x18] sm:$0xf]
    %v90 = vld [vmem:[%s1 + $0x1c] sm:$0xf]
    %v91 = vld [vmem:[%s1 + $0x20] sm:$0xf]
    %v92 = vld [vmem:[%s1 + $0x24] sm:$0xf]
    %v93 = vld [vmem:[%s1 + $0x28] sm:$0xf]
    %v94 = vld [vmem:[%s1 + $0x2c] sm:$0xf]
    %v95 = vld [vmem:[%s1 + $0x30] sm:$0xf]
    %v96 = vld [vmem:[%s1 + $0x34] sm:$0xf]
    %v97 = vld [vmem:[%s1 + $0x38] sm:$0xf]
    %v98 = vld [vmem:[%s1 + $0x3c] sm:$0xf]
    %v99 = vld [vmem:[%s2] sm:$0x1]
    %v101 = vperm.slane %v99, 0
    %v119 = vunpack.c.l.b16 %v83
    %v120 = vunpack.c.l.b16 %v84
    %v121 = vunpack.c.l.b16 %v85
    %v122 = vunpack.c.l.b16 %v86
    %v123 = vunpack.c.l.b16 %v87
    %v124 = vunpack.c.l.b16 %v88
    %v125 = vunpack.c.l.b16 %v89
    %v126 = vunpack.c.l.b16 %v90
    %v127 = vunpack.c.l.b16 %v91
    %v128 = vunpack.c.l.b16 %v92
    %v129 = vunpack.c.l.b16 %v93
    %v130 = vunpack.c.l.b16 %v94
    %v131 = vunpack.c.l.b16 %v95
    %v132 = vunpack.c.l.b16 %v96
    %v133 = vunpack.c.l.b16 %v97
    %v134 = vunpack.c.l.b16 %v98
    %v135 = vpack.c.b16 %v120, %v119
    %v136 = vpack.c.b16 %v122, %v121
    %v137 = vpack.c.b16 %v124, %v123
    %v138 = vpack.c.b16 %v126, %v125
    %v139 = vpack.c.b16 %v128, %v127
    %v140 = vpack.c.b16 %v130, %v129
    %v141 = vpack.c.b16 %v132, %v131
    %v142 = vpack.c.b16 %v134, %v133
    %151 = vmatpush.bf16.msra.mxu0 %v142
    %152 = vmatpush.bf16.msra.mxu0 %v141
    %153 = vmatpush.bf16.msra.mxu0 %v140
    %154 = vmatpush.bf16.msra.mxu0 %v139
    %155 = vmatpush.bf16.msra.mxu0 %v138
    %156 = vmatpush.bf16.msra.mxu0 %v137
    %157 = vmatpush.bf16.msra.mxu0 %v136
    %158 = vmatpush.bf16.msra.mxu0 %v135
    %159 = vmatmul.bf16.gmra.mxu0 %v75
    %v160 = vpop.f32.mrf.mxu0
    %v161 = vadd.f32 %v101, %v160
    %v162 = vpop.f32.mrf.mxu0
    %v163 = vadd.f32 %v101, %v162
    %164 = vmatmul.bf16.gmra.mxu0 %v76
    %v165 = vpop.f32.mrf.mxu0
    %v166 = vadd.f32 %v101, %v165
    %v167 = vpop.f32.mrf.mxu0
    %v168 = vadd.f32 %v101, %v167
    %169 = vmatmul.bf16.gmra.mxu0 %v77
    %v170 = vpop.f32.mrf.mxu0
    %v171 = vadd.f32 %v101, %v170
    %v172 = vpop.f32.mrf.mxu0
    %v173 = vadd.f32 %v101, %v172
    %174 = vmatmul.bf16.gmra.mxu0 %v78
    %v175 = vpop.f32.mrf.mxu0
    %v176 = vadd.f32 %v101, %v175
    %v177 = vpop.f32.mrf.mxu0
    %v178 = vadd.f32 %v101, %v177
    %179 = vmatmul.bf16.gmra.mxu0 %v79
    %v180 = vpop.f32.mrf.mxu0
    %v181 = vadd.f32 %v101, %v180
    %v182 = vpop.f32.mrf.mxu0
    %v183 = vadd.f32 %v101, %v182
    %184 = vmatmul.bf16.gmra.mxu0 %v80
    %v185 = vpop.f32.mrf.mxu0
    %v186 = vadd.f32 %v101, %v185
    %v187 = vpop.f32.mrf.mxu0
    %v188 = vadd.f32 %v101, %v187
    %189 = vmatmul.bf16.gmra.mxu0 %v81
    %v190 = vpop.f32.mrf.mxu0
    %v191 = vadd.f32 %v101, %v190
    %v192 = vpop.f32.mrf.mxu0
    %v193 = vadd.f32 %v101, %v192
    %194 = vmatmul.bf16.gmra.mxu0 %v82
    %v195 = vpop.f32.mrf.mxu0
    %v196 = vadd.f32 %v101, %v195
    %v197 = vpop.f32.mrf.mxu0
    %v198 = vadd.f32 %v101, %v197
    %199 = vdwg.mxu0
    %v200 = vmax.f32 %v161, 0.0
    %v201 = vmax.f32 %v163, 0.0
    %v202 = vmax.f32 %v166, 0.0
    %v203 = vmax.f32 %v168, 0.0
    %v204 = vmax.f32 %v171, 0.0
    %v205 = vmax.f32 %v173, 0.0
    %v206 = vmax.f32 %v176, 0.0
    %v207 = vmax.f32 %v178, 0.0
    %v208 = vmax.f32 %v181, 0.0
    %v209 = vmax.f32 %v183, 0.0
    %v210 = vmax.f32 %v186, 0.0
    %v211 = vmax.f32 %v188, 0.0
    %v212 = vmax.f32 %v191, 0.0
    %v213 = vmax.f32 %v193, 0.0
    %v214 = vmax.f32 %v196, 0.0
    %v215 = vmax.f32 %v198, 0.0
    %v216 = vpack.c.bf16 %v201, %v200
    %v217 = vpack.c.bf16 %v203, %v202
    %v218 = vpack.c.bf16 %v205, %v204
    %v219 = vpack.c.bf16 %v207, %v206
    %v220 = vpack.c.bf16 %v209, %v208
    %v221 = vpack.c.bf16 %v211, %v210
    %v222 = vpack.c.bf16 %v213, %v212
    %v223 = vpack.c.bf16 %v215, %v214
    %v224 = vld [vmem:[#allocation5] sm:$0xf]
    %v225 = vld [vmem:[#allocation5 + $0x4] sm:$0xf]
    %v226 = vld [vmem:[#allocation5 + $0x8] sm:$0xf]
    %v227 = vld [vmem:[#allocation5 + $0xc] sm:$0xf]
    %v228 = vld [vmem:[#allocation5 + $0x10] sm:$0xf]
    %v229 = vld [vmem:[#allocation5 + $0x14] sm:$0xf]
    %v230 = vld [vmem:[#allocation5 + $0x18] sm:$0xf]
    %v231 = vld [vmem:[#allocation5 + $0x1c] sm:$0xf]
    %v232 = vld [vmem:[#allocation5 + $0x20] sm:$0xf]
    %v233 = vld [vmem:[#allocation5 + $0x24] sm:$0xf]
    %v234 = vld [vmem:[#allocation5 + $0x28] sm:$0xf]
    %v235 = vld [vmem:[#allocation5 + $0x2c] sm:$0xf]
    %v236 = vld [vmem:[#allocation5 + $0x30] sm:$0xf]
    %v237 = vld [vmem:[#allocation5 + $0x34] sm:$0xf]
    %v238 = vld [vmem:[#allocation5 + $0x38] sm:$0xf]
    %v239 = vld [vmem:[#allocation5 + $0x3c] sm:$0xf]
    %v240 = vld [vmem:[%s4] sm:$0x1]
    %v242 = vperm.slane %v240, 0
    %v260 = vunpack.c.l.b16 %v224
    %v261 = vunpack.c.l.b16 %v225
    %v262 = vunpack.c.l.b16 %v226
    %v263 = vunpack.c.l.b16 %v227
    %v264 = vunpack.c.l.b16 %v228
    %v265 = vunpack.c.l.b16 %v229
    %v266 = vunpack.c.l.b16 %v230
    %v267 = vunpack.c.l.b16 %v231
    %v268 = vunpack.c.l.b16 %v232
    %v269 = vunpack.c.l.b16 %v233
    %v270 = vunpack.c.l.b16 %v234
    %v271 = vunpack.c.l.b16 %v235
    %v272 = vunpack.c.l.b16 %v236
    %v273 = vunpack.c.l.b16 %v237
    %v274 = vunpack.c.l.b16 %v238
    %v275 = vunpack.c.l.b16 %v239
    %v276 = vpack.c.b16 %v261, %v260
    %v277 = vpack.c.b16 %v263, %v262
    %v278 = vpack.c.b16 %v265, %v264
    %v279 = vpack.c.b16 %v267, %v266
    %v280 = vpack.c.b16 %v269, %v268
    %v281 = vpack.c.b16 %v271, %v270
    %v282 = vpack.c.b16 %v273, %v272
    %v283 = vpack.c.b16 %v275, %v274
    %292 = vmatpush.bf16.msra.mxu0 %v283
    %293 = vmatpush.bf16.msra.mxu0 %v282
    %294 = vmatpush.bf16.msra.mxu0 %v281
    %295 = vmatpush.bf16.msra.mxu0 %v280
    %296 = vmatpush.bf16.msra.mxu0 %v279
    %297 = vmatpush.bf16.msra.mxu0 %v278
    %298 = vmatpush.bf16.msra.mxu0 %v277
    %299 = vmatpush.bf16.msra.mxu0 %v276
    %300 = vmatmul.bf16.gmra.mxu0 %v216
    %v301 = vpop.f32.mrf.mxu0
    %v302 = vadd.f32 %v242, %v301
    %v303 = vpop.f32.mrf.mxu0
    %v304 = vadd.f32 %v242, %v303
    %305 = vmatmul.bf16.gmra.mxu0 %v217
    %v306 = vpop.f32.mrf.mxu0
    %v307 = vadd.f32 %v242, %v306
    %v308 = vpop.f32.mrf.mxu0
    %v309 = vadd.f32 %v242, %v308
    %310 = vmatmul.bf16.gmra.mxu0 %v218
    %v311 = vpop.f32.mrf.mxu0
    %v312 = vadd.f32 %v242, %v311
    %v313 = vpop.f32.mrf.mxu0
    %v314 = vadd.f32 %v242, %v313
    %315 = vmatmul.bf16.gmra.mxu0 %v219
    %v316 = vpop.f32.mrf.mxu0
    %v317 = vadd.f32 %v242, %v316
    %v318 = vpop.f32.mrf.mxu0
    %v319 = vadd.f32 %v242, %v318
    %320 = vmatmul.bf16.gmra.mxu0 %v220
    %v321 = vpop.f32.mrf.mxu0
    %v322 = vadd.f32 %v242, %v321
    %v323 = vpop.f32.mrf.mxu0
    %v324 = vadd.f32 %v242, %v323
    %325 = vmatmul.bf16.gmra.mxu0 %v221
    %v326 = vpop.f32.mrf.mxu0
    %v327 = vadd.f32 %v242, %v326
    %v328 = vpop.f32.mrf.mxu0
    %v329 = vadd.f32 %v242, %v328
    %330 = vmatmul.bf16.gmra.mxu0 %v222
    %v331 = vpop.f32.mrf.mxu0
    %v332 = vadd.f32 %v242, %v331
    %v333 = vpop.f32.mrf.mxu0
    %v334 = vadd.f32 %v242, %v333
    %335 = vmatmul.bf16.gmra.mxu0 %v223
    %v336 = vpop.f32.mrf.mxu0
    %v337 = vadd.f32 %v242, %v336
    %v338 = vpop.f32.mrf.mxu0
    %v339 = vadd.f32 %v242, %v338
    %340 = vdwg.mxu0
    %v341 = vmax.f32 %v302, 0.0
    %v342 = vmax.f32 %v304, 0.0
    %v343 = vmax.f32 %v307, 0.0
    %v344 = vmax.f32 %v309, 0.0
    %v345 = vmax.f32 %v312, 0.0
    %v346 = vmax.f32 %v314, 0.0
    %v347 = vmax.f32 %v317, 0.0
    %v348 = vmax.f32 %v319, 0.0
    %v349 = vmax.f32 %v322, 0.0
    %v350 = vmax.f32 %v324, 0.0
    %v351 = vmax.f32 %v327, 0.0
    %v352 = vmax.f32 %v329, 0.0
    %v353 = vmax.f32 %v332, 0.0
    %v354 = vmax.f32 %v334, 0.0
    %v355 = vmax.f32 %v337, 0.0
    %v356 = vmax.f32 %v339, 0.0
    %v357 = vpack.c.bf16 %v342, %v341
    %v358 = vpack.c.bf16 %v344, %v343
    %v359 = vpack.c.bf16 %v346, %v345
    %v360 = vpack.c.bf16 %v348, %v347
    %v361 = vpack.c.bf16 %v350, %v349
    %v362 = vpack.c.bf16 %v352, %v351
    %v363 = vpack.c.bf16 %v354, %v353
    %v364 = vpack.c.bf16 %v356, %v355
    %v365 = vld [vmem:[%s5] sm:$0xf]
    %v366 = vld [vmem:[%s5 + $0x4] sm:$0xf]
    %v367 = vld [vmem:[%s5 + $0x8] sm:$0xf]
    %v368 = vld [vmem:[%s5 + $0xc] sm:$0xf]
    %v369 = vld [vmem:[%s5 + $0x10] sm:$0xf]
    %v370 = vld [vmem:[%s5 + $0x14] sm:$0xf]
    %v371 = vld [vmem:[%s5 + $0x18] sm:$0xf]
    %v372 = vld [vmem:[%s5 + $0x1c] sm:$0xf]
    %v373 = vld [vmem:[%s5 + $0x20] sm:$0xf]
    %v374 = vld [vmem:[%s5 + $0x24] sm:$0xf]
    %v375 = vld [vmem:[%s5 + $0x28] sm:$0xf]
    %v376 = vld [vmem:[%s5 + $0x2c] sm:$0xf]
    %v377 = vld [vmem:[%s5 + $0x30] sm:$0xf]
    %v378 = vld [vmem:[%s5 + $0x34] sm:$0xf]
    %v379 = vld [vmem:[%s5 + $0x38] sm:$0xf]
    %v380 = vld [vmem:[%s5 + $0x3c] sm:$0xf]
    %s381 = sld [smem:[#allocation2]]
    %v382 = vstv %s381
    %v399 = vunpack.c.l.b16 %v365
    %v400 = vunpack.c.l.b16 %v366
    %v401 = vunpack.c.l.b16 %v367
    %v402 = vunpack.c.l.b16 %v368
    %v403 = vunpack.c.l.b16 %v369
    %v404 = vunpack.c.l.b16 %v370
    %v405 = vunpack.c.l.b16 %v371
    %v406 = vunpack.c.l.b16 %v372
    %v407 = vunpack.c.l.b16 %v373
    %v408 = vunpack.c.l.b16 %v374
    %v409 = vunpack.c.l.b16 %v375
    %v410 = vunpack.c.l.b16 %v376
    %v411 = vunpack.c.l.b16 %v377
    %v412 = vunpack.c.l.b16 %v378
    %v413 = vunpack.c.l.b16 %v379
    %v414 = vunpack.c.l.b16 %v380
    %v415 = vpack.c.b16 %v400, %v399
    %v416 = vpack.c.b16 %v402, %v401
    %v417 = vpack.c.b16 %v404, %v403
    %v418 = vpack.c.b16 %v406, %v405
    %v419 = vpack.c.b16 %v408, %v407
    %v420 = vpack.c.b16 %v410, %v409
    %v421 = vpack.c.b16 %v412, %v411
    %v422 = vpack.c.b16 %v414, %v413
    %431 = vmatpush.bf16.msra.mxu0 %v422
    %432 = vmatpush.bf16.msra.mxu0 %v421
    %433 = vmatpush.bf16.msra.mxu0 %v420
    %434 = vmatpush.bf16.msra.mxu0 %v419
    %435 = vmatpush.bf16.msra.mxu0 %v418
    %436 = vmatpush.bf16.msra.mxu0 %v417
    %437 = vmatpush.bf16.msra.mxu0 %v416
    %438 = vmatpush.bf16.msra.mxu0 %v415
    %439 = vmatmul.bf16.gmra.mxu0 %v357
    %v440 = vpop.f32.mrf.mxu0
    %v441 = vadd.f32 %v382, %v440
    %v442 = vpop.f32.mrf.mxu0
    %v443 = vadd.f32 %v382, %v442
    %444 = vmatmul.bf16.gmra.mxu0 %v358
    %v445 = vpop.f32.mrf.mxu0
    %v446 = vadd.f32 %v382, %v445
    %v447 = vpop.f32.mrf.mxu0
    %v448 = vadd.f32 %v382, %v447
    %449 = vmatmul.bf16.gmra.mxu0 %v359
    %v450 = vpop.f32.mrf.mxu0
    %v451 = vadd.f32 %v382, %v450
    %v452 = vpop.f32.mrf.mxu0
    %v453 = vadd.f32 %v382, %v452
    %454 = vmatmul.bf16.gmra.mxu0 %v360
    %v455 = vpop.f32.mrf.mxu0
    %v456 = vadd.f32 %v382, %v455
    %v457 = vpop.f32.mrf.mxu0
    %v458 = vadd.f32 %v382, %v457
    %459 = vmatmul.bf16.gmra.mxu0 %v361
    %v460 = vpop.f32.mrf.mxu0
    %v461 = vadd.f32 %v382, %v460
    %v462 = vpop.f32.mrf.mxu0
    %v463 = vadd.f32 %v382, %v462
    %464 = vmatmul.bf16.gmra.mxu0 %v362
    %v465 = vpop.f32.mrf.mxu0
    %v466 = vadd.f32 %v382, %v465
    %v467 = vpop.f32.mrf.mxu0
    %v468 = vadd.f32 %v382, %v467
    %469 = vmatmul.bf16.gmra.mxu0 %v363
    %v470 = vpop.f32.mrf.mxu0
    %v471 = vadd.f32 %v382, %v470
    %v472 = vpop.f32.mrf.mxu0
    %v473 = vadd.f32 %v382, %v472
    %474 = vmatmul.bf16.gmra.mxu0 %v364
    %v475 = vpop.f32.mrf.mxu0
    %v476 = vadd.f32 %v382, %v475
    %v477 = vpop.f32.mrf.mxu0
    %v478 = vadd.f32 %v382, %v477
    %479 = vdwg.mxu0
    %vm480 = vcmask 7168
    %481 = vst.msk [vmem:[%s7] sm:$0xff] %vm480, %v441
    %482 = vst.msk [vmem:[%s7 + $0x8] sm:$0xff] %vm480, %v443
    %483 = vst.msk [vmem:[%s7 + $0x10] sm:$0xff] %vm480, %v446
    %484 = vst.msk [vmem:[%s7 + $0x18] sm:$0xff] %vm480, %v448
    %485 = vst.msk [vmem:[%s7 + $0x20] sm:$0xff] %vm480, %v451
    %486 = vst.msk [vmem:[%s7 + $0x28] sm:$0xff] %vm480, %v453
    %487 = vst.msk [vmem:[%s7 + $0x30] sm:$0xff] %vm480, %v456
    %488 = vst.msk [vmem:[%s7 + $0x38] sm:$0xff] %vm480, %v458
    %489 = vst.msk [vmem:[%s7 + $0x40] sm:$0xff] %vm480, %v461
    %490 = vst.msk [vmem:[%s7 + $0x48] sm:$0xff] %vm480, %v463
    %491 = vst.msk [vmem:[%s7 + $0x50] sm:$0xff] %vm480, %v466
    %492 = vst.msk [vmem:[%s7 + $0x58] sm:$0xff] %vm480, %v468
    %493 = vst.msk [vmem:[%s7 + $0x60] sm:$0xff] %vm480, %v471
    %494 = vst.msk [vmem:[%s7 + $0x68] sm:$0xff] %vm480, %v473
    %495 = vst.msk [vmem:[%s7 + $0x70] sm:$0xff] %vm480, %v476
    %496 = vst.msk [vmem:[%s7 + $0x78] sm:$0xff] %vm480, %v478
    // Predicated region
    $region38: #{tpu_custom_call.1} parent=1 // pred_check
      _
    $region39: #{tpu_custom_call.1} parent=1 // pred_check_branch
      %498 = sbr.rel (0) target = $region41
    $region40: #{tpu_custom_call.1} parent=1 // pred_region
      _
    $region41: #{tpu_custom_call.1} parent=1 // pred_fallthru
      _
    // Predicated region
    $region42: #{tpu_custom_call.1} parent=1 // pred_check
      _
    $region43: #{tpu_custom_call.1} parent=1 // pred_check_branch
      %500 = sbr.rel (0) target = $region45
    $region44: #{tpu_custom_call.1} parent=1 // pred_region
      _
    $region45: #{tpu_custom_call.1} parent=1 // pred_fallthru
      _
    %501 = vsyncpa [#allocation4], 1
    %502 = vsyncpa [#allocation6], 1

</llo_original>
